<compile_context>
chip_gen: v5e
topology: v5e:2x2
jax: 0.10.0
libtpu: 0.0.40
codegen_flags: <defaults>
</compile_context>

<pallas_src>
import functools

import jax
import jax.numpy as jnp
from jax.experimental import pallas as pl
from jax.experimental.pallas import tpu as pltpu

_MAX_BLOCK_M = 1024  # row-tile cap; sweepable


# ----------------------------- Linear kernel -----------------------------
def _linear_kernel(x_ref, w_ref, b_ref, o_ref):
    """x_ref: (block_m, F) bf16  w_ref: (F, C) bf16  b_ref: (1, C) f32  o_ref: (block_m, C) f32."""
    o_ref[...] = (
        jnp.dot(x_ref[...], w_ref[...], preferred_element_type=jnp.float32)
        + b_ref[...]
    ).astype(o_ref.dtype)


def _run_linear(x2d, w, b2d):
    """x2d: (N, F) bf16, w: (F, C) bf16, b2d: (1, C) f32 -> (N, C) f32."""
    n, feat = x2d.shape
    nb_class = w.shape[1]

    if n <= _MAX_BLOCK_M:
        # Single block spanning the whole row axis (block dim == array dim is
        # always a legal BlockSpec, no alignment padding needed anywhere).
        block_m = n
    else:
        # Multiple of 8 (sublane); ragged last block is masked by Pallas.
        block_m = _MAX_BLOCK_M
    grid_m = pl.cdiv(n, block_m)

    return pl.pallas_call(
        _linear_kernel,
        out_shape=jax.ShapeDtypeStruct((n, nb_class), jnp.float32),
        grid_spec=pltpu.PrefetchScalarGridSpec(
            num_scalar_prefetch=0,
            grid=(grid_m,),
            in_specs=[
                pl.BlockSpec((block_m, feat), lambda i: (i, 0)),
                pl.BlockSpec((feat, nb_class), lambda i: (0, 0)),   # VMEM-resident
                pl.BlockSpec((1, nb_class), lambda i: (0, 0)),      # VMEM-resident
            ],
            out_specs=pl.BlockSpec((block_m, nb_class), lambda i: (i, 0)),
        ),
        compiler_params=pltpu.CompilerParams(
            # Row blocks are independent -> shard across TensorCores (v7x: 2 TCs).
            dimension_semantics=("parallel",),
        ),
    )(x2d, w, b2d)


# ----------------------------- Parameter construction -----------------------------
def init_params(key, nb_feat, nb_class, *, use_bias=True):
    """Mimic PyTorch nn.Linear init: U(-1/sqrt(in_features), 1/sqrt(in_features))."""
    k = 1.0 / jnp.sqrt(jnp.float32(nb_feat))
    key, kw, kb = jax.random.split(key, 3)
    w = jax.random.uniform(kw, (nb_class, nb_feat), jnp.float32, -k, k)  # PyTorch layout (C, F)
    if use_bias:
        b = jax.random.uniform(kb, (nb_class,), jnp.float32, -k, k)
    else:
        b = jnp.zeros((nb_class,), jnp.float32)

    w_t = jnp.transpose(w)                      # (F, C), done once at init
    return {
        "w_bf16": w_t.astype(jnp.bfloat16),     # kernel operand
        "b2d": b.reshape(1, nb_class),          # kernel operand (f32)
        "w_t": w_t,                             # f32, for the reference check
        "b": b,                                 # (C,), for the reference check
    }


# ----------------------------- Forward (matches LinearSecondModel.forward) -----------------------------
@functools.partial(jax.jit, static_argnames=("batch_size", "nb_class"))
def linear_second_model_forward(params, x, *, batch_size, nb_class):
    # dropout: identity in eval/inference mode.
    # TODO(synk): training-mode stochastic dropout (pltpu.prng_* mask) not implemented.
    feat = x.shape[-1]
    x2d = jnp.reshape(x, (-1, feat)).astype(jnp.bfloat16)   # (N, F), N = batch*seq
    out = _run_linear(x2d, params["w_bf16"], params["b2d"])  # (N, C) f32, no padding/slicing
    pred = jnp.reshape(out, (batch_size, -1, nb_class))      # x.view(batchSize, -1, nbClass)
    return {"pred": pred}


if __name__ == "__main__":
    NB_FEAT = 16
    NB_CLASS = 4
    BATCH = 2
    SEQ = 8

    key = jax.random.PRNGKey(0)
    key, pk, xk = jax.random.split(key, 3)
    params = init_params(pk, NB_FEAT, NB_CLASS, use_bias=True)

    # Flattened (batch*seq, feat) input, as the module expects (it re-views by batchSize).
    x = jax.random.normal(xk, (BATCH * SEQ, NB_FEAT), jnp.float32)

    out = linear_second_model_forward(params, x, batch_size=BATCH, nb_class=NB_CLASS)
    pred = jax.block_until_ready(out["pred"])

    assert pred.shape == (BATCH, SEQ, NB_CLASS), pred.shape
    assert jnp.all(jnp.isfinite(pred))

    # Reference check against plain JAX using the same bf16 matmul / f32 accumulation.
    ref_bf16 = (
        jnp.dot(x.astype(jnp.bfloat16), params["w_t"].astype(jnp.bfloat16),
                preferred_element_type=jnp.float32)
        + params["b"]
    ).reshape(BATCH, SEQ, NB_CLASS)
    assert jnp.allclose(pred, ref_bf16, atol=1e-3, rtol=1e-3), \
        float(jnp.max(jnp.abs(pred - ref_bf16)))

    # Sanity against the full-f32 reference (bf16 input rounding tolerance).
    ref_f32 = (x @ params["w_t"] + params["b"]).reshape(BATCH, SEQ, NB_CLASS)
    assert jnp.allclose(pred, ref_f32, atol=5e-2, rtol=5e-2), \
        float(jnp.max(jnp.abs(pred - ref_f32)))

    print("KERNEL_OK")
</pallas_src>

<mosaic_0001>
module attributes {stable_mosaic.version = 11 : i64} {
  func.func @_linear_kernel(%arg0: i32, %arg1: memref<16x16xbf16, #tpu.memory_space<vmem>>, %arg2: memref<16x4xbf16, #tpu.memory_space<vmem>>, %arg3: memref<1x4xf32, #tpu.memory_space<vmem>>, %arg4: memref<16x4xf32, #tpu.memory_space<vmem>>) attributes {dimension_semantics = [#tpu.dimension_semantics<parallel>], iteration_bounds = array<i64: 1>, scalar_prefetch = 0 : i64, scratch_operands = 0 : i64, tpu.core_type = #tpu.core_type<tc>, window_params = [{transform_indices = @transform_0, window_bounds = array<i64: 16, 16>}, {pipeline_mode = #tpu.pipeline_mode<synchronous>, transform_indices = @transform_1, window_bounds = array<i64: 16, 4>}, {pipeline_mode = #tpu.pipeline_mode<synchronous>, transform_indices = @transform_2, window_bounds = array<i64: 1, 4>}, {transform_indices = @transform_3, window_bounds = array<i64: 16, 4>}]} {
    %c0 = arith.constant 0 : index
    %c0_0 = arith.constant 0 : index
    %0 = vector.load %arg1[%c0, %c0_0] : memref<16x16xbf16, #tpu.memory_space<vmem>>, vector<16x16xbf16>
    %c0_1 = arith.constant 0 : index
    %c0_2 = arith.constant 0 : index
    %1 = vector.load %arg2[%c0_1, %c0_2] : memref<16x4xbf16, #tpu.memory_space<vmem>>, vector<16x4xbf16>
    %cst = arith.constant dense<0.000000e+00> : vector<16x4xf32>
    %2 = tpu.matmul %0, %1, %cst {dimension_numbers = #tpu.dot_dimension_numbers<[1], [0], [0], [1], [0, 0, 1, 1], [], []>} : vector<16x16xbf16>, vector<16x4xbf16>, vector<16x4xf32> -> vector<16x4xf32>
    %c0_3 = arith.constant 0 : index
    %c0_4 = arith.constant 0 : index
    %3 = vector.load %arg3[%c0_3, %c0_4] : memref<1x4xf32, #tpu.memory_space<vmem>>, vector<1x4xf32>
    %4 = vector.broadcast %3 : vector<1x4xf32> to vector<16x4xf32>
    %5 = arith.addf %2, %4 : vector<16x4xf32>
    %c0_5 = arith.constant 0 : index
    %c0_6 = arith.constant 0 : index
    %6 = vector.load %arg4[%c0_5, %c0_6] : memref<16x4xf32, #tpu.memory_space<vmem>>, vector<16x4xf32>
    tpu.vector_store %arg4[%c0_5, %c0_6], %5 {strides = array<i32>} : memref<16x4xf32, #tpu.memory_space<vmem>>, vector<16x4xf32>,
    return
  }
  func.func @transform_0(%arg0: i32) -> (i32, i32) {
    %c0_i32 = arith.constant 0 : i32
    %c0_i32_0 = arith.constant 0 : i32
    return %arg0, %c0_i32 : i32, i32
  }
  func.func @transform_1(%arg0: i32) -> (i32, i32) {
    %c0_i32 = arith.constant 0 : i32
    %c0_i32_0 = arith.constant 0 : i32
    %c0_i32_1 = arith.constant 0 : i32
    return %c0_i32, %c0_i32_0 : i32, i32
  }
  func.func @transform_2(%arg0: i32) -> (i32, i32) {
    %c0_i32 = arith.constant 0 : i32
    %c0_i32_0 = arith.constant 0 : i32
    %c0_i32_1 = arith.constant 0 : i32
    return %c0_i32, %c0_i32_0 : i32, i32
  }
  func.func @transform_3(%arg0: i32) -> (i32, i32) {
    %c0_i32 = arith.constant 0 : i32
    %c0_i32_0 = arith.constant 0 : i32
    return %arg0, %c0_i32 : i32, i32
  }
}

</mosaic_0001>

<llo_original>
// kernel: linear_second_model_forward.1
$region0: #{linear_second_model_forward.1}
  #allocation0 [shape = 'u32[]', space=smem, size = 0x4, offset = 0x4, fixed_abs, tag = 'smem constant byte address 0x4 - core index']
  #allocation1 [shape = 'u32[72,128]{1,0:T(1,128)}', space=vmem, size = 0x9000, scoped, tag = 'internal scratch']
  %s0 = inlined_call_operand.vmem [shape: bf16[16,16], index: 0, kind: input, shape index: {}]
  %s1 = inlined_call_operand.vmem [shape: bf16[16,4], index: 1, kind: input, shape index: {}]
  %s2 = inlined_call_operand.vmem [shape: f32[1,4], index: 2, kind: input, shape index: {}]
  %s3 = inlined_call_operand.vmem [shape: f32[16,4], index: 3, kind: output, shape index: {}]
  %s4 = sld [smem:[#allocation0]]
  $region22: #{linear_second_model_forward.1} parent=0
    _
  %s6 = ssub.s32 1, %s4
  %s7 = scalar_select 0, %s6, %s4
  // Predicated region
  $region2: #{linear_second_model_forward.1} parent=0 // pred_check
    _
  $region3: #{linear_second_model_forward.1} parent=0 // pred_check_branch
    %9 = sbr.rel (0) target = $region5
  $region4: #{linear_second_model_forward.1} parent=0 // pred_region
    _
  $region5: #{linear_second_model_forward.1} parent=0 // pred_fallthru
    _
  // Predicated region
  $region6: #{linear_second_model_forward.1} parent=0 // pred_check
    _
  $region7: #{linear_second_model_forward.1} parent=0 // pred_check_branch
    %11 = sbr.rel (0) target = $region9
  $region8: #{linear_second_model_forward.1} parent=0 // pred_region
    _
  $region9: #{linear_second_model_forward.1} parent=0 // pred_fallthru
    _
  // Predicated region
  $region10: #{linear_second_model_forward.1} parent=0 // pred_check
    _
  $region11: #{linear_second_model_forward.1} parent=0 // pred_check_branch
    %13 = sbr.rel (0) target = $region13
  $region12: #{linear_second_model_forward.1} parent=0 // pred_region
    _
  $region13: #{linear_second_model_forward.1} parent=0 // pred_fallthru
    _
  %v15 = vld [vmem:[%s0] sm:$0xf]
  %v16 = vld [vmem:[%s0 + $0x4] sm:$0xf]
  %v17 = vld [vmem:[%s1] sm:$0xf]
  %v18 = vld [vmem:[%s1 + $0x4] sm:$0xf]
  %v19 = vld [vmem:[%s2] sm:$0x1]
  %v21 = vperm.slane %v19, 0
  %v25 = vunpack.c.l.b16 %v15
  %v26 = vunpack.c.l.b16 %v16
  %v27 = vpack.c.b16 %v26, %v25
  %v30 = vunpack.c.l.b16 %v17
  %v31 = vunpack.c.l.b16 %v18
  %v32 = vpack.c.b16 %v31, %v30
  %vm34 = vcmask 130048
  %v36 = vsel %vm34, %v27, 0
  %38 = vmatpush.bf16.msra.mxu0 0
  %39 = vmatpush.bf16.msra.mxu0 0
  %40 = vmatpush.bf16.msra.mxu0 0
  %41 = vmatpush.bf16.msra.mxu0 0
  %42 = vmatpush.bf16.msra.mxu0 0
  %43 = vmatpush.bf16.msra.mxu0 0
  %44 = vmatpush.bf16.msra.mxu0 0
  %45 = vmatpush.bf16.msra.mxu0 %v32
  %46 = vmatmul.bf16.gmra.mxu0 %v36
  %v47 = vpop.f32.mrf.mxu0
  %v48 = vadd.f32 %v21, %v47
  %v49 = vpop.f32.mrf.mxu0
  %v50 = vadd.f32 %v21, %v49
  %51 = vdwg.mxu0
  %vm52 = vcmask 31744
  %53 = vst.msk [vmem:[%s3] sm:$0xff] %vm52, %v48
  %54 = vst.msk [vmem:[%s3 + $0x8] sm:$0xff] %vm52, %v50
  // Predicated region
  $region14: #{linear_second_model_forward.1} parent=0 // pred_check
    _
  $region15: #{linear_second_model_forward.1} parent=0 // pred_check_branch
    %56 = sbr.rel (0) target = $region17
  $region16: #{linear_second_model_forward.1} parent=0 // pred_region
    _
  $region17: #{linear_second_model_forward.1} parent=0 // pred_fallthru
    _
  // Predicated region
  $region18: #{linear_second_model_forward.1} parent=0 // pred_check
    _
  $region19: #{linear_second_model_forward.1} parent=0 // pred_check_branch
    %58 = sbr.rel (0) target = $region21
  $region20: #{linear_second_model_forward.1} parent=0 // pred_region
    _
  $region21: #{linear_second_model_forward.1} parent=0 // pred_fallthru
    _

</llo_original>
